<compile_context>
chip_gen: v7x
topology: tpu7x:2x2x1
jax: 0.10.0
libtpu: 0.0.40
codegen_flags: <defaults>
</compile_context>

<pallas_src>
import jax
import jax.numpy as jnp
from jax.experimental import pallas as pl
from jax.experimental.pallas import tpu as pltpu


def pad_block_kernel(x_ref, o_ref):
    # x_ref: (1, C, T)    o_ref: (1, 2C, T)   -- T = lane-dense flattened-spatial tile.
    c = x_ref.shape[1]
    t = x_ref.shape[2]
    o_ref[:, :c, :] = x_ref[...]                                  # first C channels = x
    o_ref[:, c:, :] = jnp.zeros((1, c, t), o_ref.dtype)           # last C channels = 0


def _spatial_tile(hw, max_tile=8192):
    """Largest lane-dense (multiple-of-128) divisor of hw that is <= max_tile."""
    if hw <= max_tile:
        return hw
    for t in range(max_tile - max_tile % 128, 127, -128):
        if hw % t == 0:
            return t
    return hw  # fall back to full extent (always a legal block shape)


def pad_block(x):
    """x: (N, C, H, W) -> (N, 2C, H, W) == concat([x, zeros_like(x)], axis=1)."""
    N, C, H, W = x.shape
    hw = H * W
    tile = _spatial_tile(hw)
    n_sp = hw // tile

    x2 = x.reshape(N, C, hw)  # contiguous reshape: free, puts H*W on the lane axis

    out = pl.pallas_call(
        pad_block_kernel,
        out_shape=jax.ShapeDtypeStruct((N, 2 * C, hw), x.dtype),
        grid=(N, n_sp),
        in_specs=[pl.BlockSpec((1, C, tile), lambda n, s: (n, 0, s))],
        out_specs=pl.BlockSpec((1, 2 * C, tile), lambda n, s: (n, 0, s)),
        compiler_params=pltpu.CompilerParams(
            dimension_semantics=("parallel", "parallel")),
        cost_estimate=pl.CostEstimate(
            flops=0,
            transcendentals=0,
            # read x once, write x-half + zero-half of the output
            bytes_accessed=3 * x.size * x.dtype.itemsize),
    )(x2)

    return out.reshape(N, 2 * C, H, W)


if __name__ == "__main__":
    N, C, H, W = 2, 4, 16, 16
    key = jax.random.PRNGKey(0)
    x = jax.random.normal(key, (N, C, H, W), jnp.float32)

    out = jax.block_until_ready(pad_block(x))

    ref = jnp.concatenate([x, jnp.zeros_like(x)], axis=1)
    assert out.shape == (N, 2 * C, H, W), out.shape
    err = float(jnp.max(jnp.abs(out - ref)))
    assert err < 1e-6, f"max abs error vs reference: {err}"
    print("KERNEL_OK")
</pallas_src>

<mosaic_0001>
module attributes {stable_mosaic.version = 11 : i64} {
  func.func @pad_block_kernel(%arg0: i32, %arg1: i32, %arg2: memref<1x4x256xf32, #tpu.memory_space<vmem>>, %arg3: memref<1x8x256xf32, #tpu.memory_space<vmem>>) attributes {dimension_semantics = [#tpu.dimension_semantics<parallel>, #tpu.dimension_semantics<parallel>], iteration_bounds = array<i64: 2, 1>, scalar_prefetch = 0 : i64, scratch_operands = 0 : i64, tpu.core_type = #tpu.core_type<tc>, window_params = [{transform_indices = @transform_0, window_bounds = array<i64: 1, 4, 256>}, {transform_indices = @transform_1, window_bounds = array<i64: 1, 8, 256>}]} {
    %c0 = arith.constant 0 : index
    %c0_0 = arith.constant 0 : index
    %c0_1 = arith.constant 0 : index
    %0 = vector.load %arg2[%c0, %c0_0, %c0_1] : memref<1x4x256xf32, #tpu.memory_space<vmem>>, vector<1x4x256xf32>
    %c0_2 = arith.constant 0 : index
    %c0_3 = arith.constant 0 : index
    %c0_4 = arith.constant 0 : index
    %1 = vector.load %arg3[%c0_2, %c0_3, %c0_4] : memref<1x8x256xf32, #tpu.memory_space<vmem>>, vector<1x4x256xf32>
    tpu.vector_store %arg3[%c0_2, %c0_3, %c0_4], %0 {strides = array<i32>} : memref<1x8x256xf32, #tpu.memory_space<vmem>>, vector<1x4x256xf32>,
    %cst = arith.constant 0.000000e+00 : f32
    %2 = vector.broadcast %cst : f32 to vector<1x4x256xf32>
    %c0_5 = arith.constant 0 : index
    %c4 = arith.constant 4 : index
    %c0_6 = arith.constant 0 : index
    %3 = vector.load %arg3[%c0_5, %c4, %c0_6] : memref<1x8x256xf32, #tpu.memory_space<vmem>>, vector<1x4x256xf32>
    tpu.vector_store %arg3[%c0_5, %c4, %c0_6], %2 {strides = array<i32>} : memref<1x8x256xf32, #tpu.memory_space<vmem>>, vector<1x4x256xf32>,
    return
  }
  func.func @transform_0(%arg0: i32, %arg1: i32) -> (i32, i32, i32) {
    %c0_i32 = arith.constant 0 : i32
    %c0_i32_0 = arith.constant 0 : i32
    return %arg0, %c0_i32, %arg1 : i32, i32, i32
  }
  func.func @transform_1(%arg0: i32, %arg1: i32) -> (i32, i32, i32) {
    %c0_i32 = arith.constant 0 : i32
    %c0_i32_0 = arith.constant 0 : i32
    return %arg0, %c0_i32, %arg1 : i32, i32, i32
  }
}

</mosaic_0001>

<llo_original>
// kernel: tpu_custom_call.1
$region0: #{tpu_custom_call.1}
  #allocation0 [shape = 'u32[]', space=smem, size = 0x4, offset = 0x4, fixed_abs, tag = 'smem constant byte address 0x4 - core index']
  #allocation1 [shape = 'u32[144,128]{1,0:T(1,128)}', space=vmem, size = 0x12000, scoped, tag = 'internal scratch']
  %s0 = inlined_call_operand.hbm [shape: f32[2,4,256], index: 0, kind: input, shape index: {}]
  %s1 = inlined_call_operand.hbm [shape: f32[2,8,256], index: 1, kind: output, shape index: {}]
  %s2 = sld [smem:[#allocation0]]
  $region41: #{tpu_custom_call.1} parent=0
    _
  %s4 = ssub.s32 1, %s2
  %s5 = scalar_select 0, %s4, %s2
  $region1: #{tpu_custom_call.1} parent=0
    #allocation2 [shape = 'u8[8192]{0}', space=vmem, size = 0x2000, scoped, tag = 'input window, operand 0']
    #allocation3 [shape = 's32[2]{0}', space=sflag, size = 0x8, scoped, tag = 'scoped memory for tpu_custom_call.1']
    #allocation4 [shape = 's32[2]{0}', space=sflag, size = 0x8, scoped, tag = 'scoped memory for tpu_custom_call.1']
    #allocation5 [shape = 'u8[16384]{0}', space=vmem, size = 0x4000, scoped, tag = 'output window, operand 0']
    %6 = vsyncpa [#allocation3], 0
    %s7 = scalar_lea.sflag [#allocation3], 1
    %8 = vsyncpa %s7, 0
    %9 = vsyncpa [#allocation4], 0
    %s10 = scalar_lea.sflag [#allocation4], 1
    %11 = vsyncpa %s10, 0
    loop: start=0, step=1, limit=4
    $region2: #{tpu_custom_call.1} parent=1 // loop_pre_header
      _
    $region3: #{tpu_custom_call.1} parent=1 // loop_header
      %s13 = sphi 0, %s17
      %p14 = scmp.ge.s32.totalorder %s13, 4
      %s20 = sphi 0, %s32
      %s21 = sphi 0, %s28
      %s22 = sphi 0, %s20
      %s23 = sphi 0, %s21
      %s24 = sphi 0, %s22
      %s25 = sphi 0, %s23
      %s37 = sphi 0, %s39
      %s40 = sphi 0, %s37
      %s41 = sphi 0, %s40
      %s57 = sphi 0, %s41
      %s65 = sphi 0, %s67
      %s68 = sphi 0, %s65
      %s69 = sphi 0, %s68
      %s85 = sphi 0, %s69
    $region4: #{tpu_custom_call.1} parent=1 // loop_header_branch
      %16 = sbr.rel (%p14) target = $region8
    $region5: #{tpu_custom_call.1} parent=1 // loop_body
      %s18 = ssub.s32 %s13, 1
      %s19 = ssub.s32 %s13, 2
      %s26 = sadd.s32 1, %s21
      %p27 = scmp.ge.s32.totalorder %s26, 1
      %s28 = scalar_select %p27, 0, %s26
      %s29 = sadd.s32 1, %s20
      %s30 = scalar_select %p27, %s29, %s20
      %p31 = scmp.ge.s32.totalorder %s30, 2
      %s32 = scalar_select %p31, 0, %s30
      %s33 = ssub.s32 %s20, %s32
      %s34 = ssub.s32 %s21, %s28
      %s35 = sor.u32 %s33, %s34
      %p36 = scmp.eq.s32.totalorder %s35, 0
      %s38 = sadd.s32 %s37, 1
      %s39 = scalar_select %p36, %s37, %s38
      %p42 = pneg %p36
      %p43 = scmp.eq.s32.totalorder %s13, 1
      %p44 = por %p42, %p43
      %p45 = scmp.ne.s32.totalorder %s37, %s40
      %p46 = scmp.eq.s32.totalorder %s13, 0
      %p47 = por %p45, %p46
      %p48 = scmp.ne.s32.totalorder %s37, %s40
      %p49 = scmp.eq.s32.totalorder %s18, 1
      %p50 = por %p48, %p49
      %p51 = scmp.ne.s32.totalorder %s40, %s41
      %p52 = scmp.eq.s32.totalorder %s18, 0
      %p53 = por %p51, %p52
      %p54 = scmp.ne.s32.totalorder %s40, %s41
      %p55 = scmp.eq.s32.totalorder %s19, 1
      %p56 = por %p54, %p55
      %p58 = scmp.ne.s32.totalorder %s41, %s57
      %p59 = scmp.eq.s32.totalorder %s19, 0
      %p60 = por %p58, %p59
      %s61 = ssub.s32 %s20, %s32
      %s62 = ssub.s32 %s21, %s28
      %s63 = sor.u32 %s61, %s62
      %p64 = scmp.eq.s32.totalorder %s63, 0
      %s66 = sadd.s32 %s65, 1
      %s67 = scalar_select %p64, %s65, %s66
      %p70 = pneg %p64
      %p71 = scmp.eq.s32.totalorder %s13, 1
      %p72 = por %p70, %p71
      %p73 = scmp.ne.s32.totalorder %s65, %s68
      %p74 = scmp.eq.s32.totalorder %s13, 0
      %p75 = por %p73, %p74
      %p76 = scmp.ne.s32.totalorder %s65, %s68
      %p77 = scmp.eq.s32.totalorder %s18, 1
      %p78 = por %p76, %p77
      %p79 = scmp.ne.s32.totalorder %s68, %s69
      %p80 = scmp.eq.s32.totalorder %s18, 0
      %p81 = por %p79, %p80
      %p82 = scmp.ne.s32.totalorder %s68, %s69
      %p83 = scmp.eq.s32.totalorder %s19, 1
      %p84 = por %p82, %p83
      %p86 = scmp.ne.s32.totalorder %s69, %s85
      %p87 = scmp.eq.s32.totalorder %s19, 0
      %p88 = por %p86, %p87
      %p89 = scmp.le.s32.totalorder 1, %s13
      %p90 = scmp.lt.s32.totalorder %s13, 3
      %p91 = pnand %p89, %p90
      %p92 = pneg %p91
      // Predicated region
      $region9: #{tpu_custom_call.1} parent=5 // pred_check
        _
      $region10: #{tpu_custom_call.1} parent=5 // pred_check_branch
        %94 = sbr.rel (%p91) target = $region12
      $region11: #{tpu_custom_call.1} parent=5 // pred_region
        %s95 = ssub.s32 %s13, 1
      $region12: #{tpu_custom_call.1} parent=5 // pred_fallthru
        _
      %p96 = scmp.lt.s32.totalorder %s13, 2
      // Predicated region
      $region13: #{tpu_custom_call.1} parent=5 // pred_check
        %p97 = pneg %p96
      $region14: #{tpu_custom_call.1} parent=5 // pred_check_branch
        %99 = sbr.rel (%p97) target = $region16
      $region15: #{tpu_custom_call.1} parent=5 // pred_region
        // Predicated region
        $region17: #{tpu_custom_call.1} parent=15 // pred_check
          %p100 = pneg %p47
        $region18: #{tpu_custom_call.1} parent=15 // pred_check_branch
          %102 = sbr.rel (%p100) target = $region20
        $region19: #{tpu_custom_call.1} parent=15 // pred_region
          %s103 = sand.u32 %s37, 1
          %s104 = scalar_lea.sflag [#allocation3], %s103
          %s105 = sand.u32 %s37, 1
          %s106 = smul.addr %s105, 8
          %s107 = scalar_lea.vmem [#allocation2], %s106
          %s108 = smul.u32 2, %s21
          %s110 = ssub.s32 128, 128
          %111 = vsyncadd %s104, %s110
          %s112 = smul.addr %s20, 2
          %s113 = sadd.s32 %s108, %s112
          %s114 = smul.addr %s113, 64
          %s115 = scalar_lea.hbm %s0, %s114
          %s117 = sshll.u32 %s107, 4
          %s118 = int_to_ptr.vmem [resolvable:$true] %s117
          %120 = dma.hbm_to_vmem [thread:$0]  %s115, 128, %s118, %s104
        $region20: #{tpu_custom_call.1} parent=15 // pred_fallthru
          _
      $region16: #{tpu_custom_call.1} parent=5 // pred_fallthru
        _
      %p121 = scmp.le.s32.totalorder 1, %s13
      %p122 = scmp.lt.s32.totalorder %s13, 3
      %p123 = pnand %p121, %p122
      %p124 = pneg %p123
      // Predicated region
      $region21: #{tpu_custom_call.1} parent=5 // pred_check
        _
      $region22: #{tpu_custom_call.1} parent=5 // pred_check_branch
        %126 = sbr.rel (%p123) target = $region24
      $region23: #{tpu_custom_call.1} parent=5 // pred_region
        %s127 = ssub.s32 %s13, 1
        %s128 = sand.u32 %s40, 1
        %s129 = scalar_lea.sflag [#allocation3], %s128
        %s130 = sand.u32 %s40, 1
        %s131 = smul.addr %s130, 8
        %s132 = scalar_lea.vmem [#allocation2], %s131
        // Predicated region
        $region25: #{tpu_custom_call.1} parent=23 // pred_check
          %p133 = pneg %p53
        $region26: #{tpu_custom_call.1} parent=23 // pred_check_branch
          %135 = sbr.rel (%p133) target = $region28
        $region27: #{tpu_custom_call.1} parent=23 // pred_region
          %136 = dma.done %s129, 128
        $region28: #{tpu_custom_call.1} parent=23 // pred_fallthru
          _
        %s137 = sand.u32 %s40, 1
        %s138 = scalar_lea.sflag [#allocation3], %s137
        %s139 = sand.u32 %s40, 1
        %s140 = smul.addr %s139, 8
        %s141 = scalar_lea.vmem [#allocation2], %s140
        %p142 = pneg %p53
        %p143 = pneg %p50
        %p144 = pneg %p81
        %p145 = pneg %p78
        %s146 = sand.u32 %s68, 1
        %s147 = scalar_lea.sflag [#allocation4], %s146
        %s148 = sand.u32 %s68, 1
        %s149 = smul.addr %s148, 16
        %s150 = scalar_lea.vmem [#allocation5], %s149
        %s151 = smul.u32 2, %s23
        %s152 = smul.u32 2, %s23
        %v153 = vld [vmem:[%s132] sm:$0xff]
        %v155 = vcombine.high %v153, %v153
        %157 = vst [vmem:[%s150] sm:$0xf] %v153
        %158 = vst [vmem:[%s150 + $0x8] sm:$0xf] %v155
        %159 = vst [vmem:[%s150] sm:$0xf0] 0.0
        %160 = vst [vmem:[%s150 + $0x8] sm:$0xf0] 0.0
        %s161 = sand.u32 %s68, 1
        %s162 = scalar_lea.sflag [#allocation4], %s161
        %s163 = sand.u32 %s68, 1
        %s164 = smul.addr %s163, 16
        %s165 = scalar_lea.vmem [#allocation5], %s164
        // Predicated region
        $region29: #{tpu_custom_call.1} parent=23 // pred_check
          %p166 = pneg %p78
        $region30: #{tpu_custom_call.1} parent=23 // pred_check_branch
          %168 = sbr.rel (%p166) target = $region32
        $region31: #{tpu_custom_call.1} parent=23 // pred_region
          %s169 = smul.u32 2, %s23
          %s171 = ssub.s32 256, 256
          %172 = vsyncadd %s162, %s171
          %s173 = smul.addr %s22, 2
          %s174 = sadd.s32 %s169, %s173
          %s175 = smul.addr %s174, 128
          %s176 = scalar_lea.hbm %s1, %s175
          %s178 = sshll.u32 %s165, 4
          %s179 = int_to_ptr.vmem [resolvable:$true] %s178
          %181 = dma.vmem_to_hbm [thread:$0]  %s179, 256, %s176, %s162
        $region32: #{tpu_custom_call.1} parent=23 // pred_fallthru
          _
      $region24: #{tpu_custom_call.1} parent=5 // pred_fallthru
        _
      %p182 = scmp.le.s32.totalorder 2, %s13
      // Predicated region
      $region33: #{tpu_custom_call.1} parent=5 // pred_check
        %p183 = pneg %p182
      $region34: #{tpu_custom_call.1} parent=5 // pred_check_branch
        %185 = sbr.rel (%p183) target = $region36
      $region35: #{tpu_custom_call.1} parent=5 // pred_region
        %s186 = ssub.s32 %s13, 2
        // Predicated region
        $region37: #{tpu_custom_call.1} parent=35 // pred_check
          %p187 = pneg %p84
        $region38: #{tpu_custom_call.1} parent=35 // pred_check_branch
          %189 = sbr.rel (%p187) target = $region40
        $region39: #{tpu_custom_call.1} parent=35 // pred_region
          %s190 = sand.u32 %s69, 1
          %s191 = scalar_lea.sflag [#allocation4], %s190
          %s192 = sand.u32 %s69, 1
          %s193 = smul.addr %s192, 16
          %s194 = scalar_lea.vmem [#allocation5], %s193
          %195 = dma.done %s191, 256
        $region40: #{tpu_custom_call.1} parent=35 // pred_fallthru
          _
      $region36: #{tpu_custom_call.1} parent=5 // pred_fallthru
        _
    $region6: #{tpu_custom_call.1} parent=1 // loop_footer
      %s17 = sadd.s32 1, %s13
    $region7: #{tpu_custom_call.1} parent=1 // loop_footer_branch
      %12 = sbr.rel target = $region3
    $region8: #{tpu_custom_call.1} parent=1 // loop_exit
      _
    %196 = vsyncpa [#allocation3], 1
    %s197 = scalar_lea.sflag [#allocation3], 1
    %198 = vsyncpa %s197, 1
    %199 = vsyncpa [#allocation4], 1
    %s200 = scalar_lea.sflag [#allocation4], 1
    %201 = vsyncpa %s200, 1

</llo_original>
